<compile_context>
chip_gen: v7x
topology: tpu7x:2x2x1
jax: 0.10.0
libtpu: 0.0.40
codegen_flags: <defaults>
</compile_context>

<pallas_src>
import functools
import math

import jax
import jax.numpy as jnp
from jax.experimental import pallas as pl
from jax.experimental.pallas import tpu as pltpu

EPS = 1e-3          # matches the PyTorch module's self.eps
LANES = 128


def _round_up(x, m):
    return -(-x // m) * m


def _num_cores():
    """Best-effort TensorCores-per-chip query (2 on v7x, 1 on v5e/v6e)."""
    try:
        info = pltpu.get_tpu_info()
    except Exception:
        return 2
    for name in ("num_tensorcores", "tensorcores_per_chip",
                 "num_cores_per_chip", "num_cores"):
        v = getattr(info, name, None)
        if isinstance(v, int) and v >= 1:
            return max(1, min(2, v))
    return 2   # unknown field names -> keep the (cheap everywhere) 2-way split


def _sigloss_partial_kernel(pred_ref, gt_ref, out_ref,
                            cnt_acc, sum_acc, ssq_acc,
                            *, rows_valid, steps_per_core, max_depth):
    c = pl.program_id(0)          # core axis ("parallel")
    i = pl.program_id(1)          # streaming axis ("arbitrary")

    @pl.when(i == 0)
    def _():
        cnt_acc[...] = jnp.zeros_like(cnt_acc)
        sum_acc[...] = jnp.zeros_like(sum_acc)
        ssq_acc[...] = jnp.zeros_like(ssq_acc)

    pred = pred_ref[...].astype(jnp.float32)
    gt = gt_ref[...].astype(jnp.float32)
    bm, width = pred.shape                      # static block shape

    blk = c * steps_per_core + i                # logical (unclamped) block index

    def accumulate(row_ok):
        mask = gt > 0.0                         # valid_mask semantics
        if max_depth is not None:
            mask = jnp.logical_and(mask, gt <= max_depth)
        if row_ok is not None:
            mask = jnp.logical_and(mask, row_ok)
        # Single log + divide (EUP recip) instead of two logs.
        g = jnp.log((pred + EPS) / (gt + EPS))
        g = jnp.where(mask, g, 0.0)
        m = mask.astype(jnp.float32)
        # Per-lane partial sums; the lane reduction is deferred to the last step.
        cnt_acc[...] += jnp.sum(m, axis=0, keepdims=True)
        sum_acc[...] += jnp.sum(g, axis=0, keepdims=True)
        ssq_acc[...] += jnp.sum(g * g, axis=0, keepdims=True)

    # Only blocks that straddle the end of the array (ragged tail) or are
    # index-clamped duplicates need the per-element row mask.
    needs_row_mask = (blk + 1) * bm > rows_valid

    @pl.when(jnp.logical_not(needs_row_mask))
    def _():                                    # lean path: all rows are real data
        accumulate(None)

    @pl.when(needs_row_mask)
    def _():                                    # boundary / duplicate block
        local_row = jax.lax.broadcasted_iota(jnp.int32, (bm, width), 0)
        accumulate(blk * bm + local_row < rows_valid)

    # Fold the per-core finalize into the kernel: the last step reduces the
    # per-lane partials to three scalars in lanes 0..2 of this core's output row.
    @pl.when(i == pl.num_programs(1) - 1)
    def _():
        n = jnp.sum(cnt_acc[...], keepdims=True)    # (1, 1)
        s = jnp.sum(sum_acc[...], keepdims=True)
        ss = jnp.sum(ssq_acc[...], keepdims=True)
        lane = jax.lax.broadcasted_iota(jnp.int32, (1, LANES), 1)
        out_ref[...] = (jnp.where(lane == 0, n, 0.0)
                        + jnp.where(lane == 1, s, 0.0)
                        + jnp.where(lane == 2, ss, 0.0))


def sigloss(depth_pred, depth_gt, *, loss_weight=1.0, max_depth=None,
            block_rows=None):
    """SigLoss forward (valid_mask=True, warm_up=False). Any input shape."""
    assert depth_pred.shape == depth_gt.shape
    shape = depth_pred.shape
    total = int(math.prod(shape))

    # ---- copy-free 2-D view (no jnp.pad of the full array) --------------------
    if total % LANES == 0:
        width = LANES                            # perfect lane utilisation
    else:
        width = 1
        for d in reversed(shape):                # collapse trailing dims
            width *= int(d)
            if width >= LANES:
                break
    rows = total // width
    pred2d = depth_pred.reshape(rows, width)     # native dtype stays on the wire
    gt2d = depth_gt.reshape(rows, width)

    ncores = _num_cores()
    in_bytes = (jnp.dtype(depth_pred.dtype).itemsize
                + jnp.dtype(depth_gt.dtype).itemsize)

    # ---- block sizing ----------------------------------------------------------
    # ~4 MiB of combined input per grid step (>=2 MiB floor), but keep >=~4 steps
    # per core on large inputs so the DMA pipeline stays overlapped.
    if block_rows is None:
        target_rows = max(8, (4 << 20) // (in_bytes * width))
        floor_rows = max(8, (2 << 20) // (in_bytes * width))
        cap_rows = max(floor_rows, -(-rows // (ncores * 4)))
        bm = _round_up(min(target_rows, cap_rows), 8)
    else:
        bm = _round_up(max(int(block_rows), 8), 8)
    if bm >= rows:
        bm = rows                                # single full-extent block
    n_blocks = -(-rows // bm)
    ncores = min(ncores, n_blocks)               # don't duplicate single-block work
    spc = -(-n_blocks // ncores)                 # steps per core (arbitrary axis)

    def in_map(c, i):
        # Clamp so the DMA never targets a fully out-of-range block; clamped
        # duplicates are zeroed in-kernel by the logical row mask.
        return (jnp.minimum(c * spc + i, n_blocks - 1), 0)

    kernel = functools.partial(_sigloss_partial_kernel,
                               rows_valid=rows, steps_per_core=spc,
                               max_depth=max_depth)

    cost = pl.CostEstimate(
        flops=10 * total,
        transcendentals=2 * total,
        bytes_accessed=total * in_bytes + ncores * LANES * 4)

    parts = pl.pallas_call(
        kernel,
        out_shape=jax.ShapeDtypeStruct((ncores, 1, LANES), jnp.float32),
        grid_spec=pltpu.PrefetchScalarGridSpec(
            num_scalar_prefetch=0,
            grid=(ncores, spc),
            in_specs=[pl.BlockSpec((bm, width), in_map),
                      pl.BlockSpec((bm, width), in_map)],
            out_specs=pl.BlockSpec((None, 1, LANES), lambda c, i: (c, 0, 0)),
            scratch_shapes=[pltpu.VMEM((1, width), jnp.float32)] * 3),
        compiler_params=pltpu.CompilerParams(
            dimension_semantics=("parallel", "arbitrary")),
        cost_estimate=cost,
    )(pred2d, gt2d)

    # ---- tiny scalar epilogue --------------------------------------------------
    totals = jnp.sum(parts, axis=(0, 1))         # (LANES,): lanes 0..2 hold n, s, ss
    n, s, ss = totals[0], totals[1], totals[2]
    n_safe = jnp.maximum(n, 1.0)
    mean = s / n_safe
    # torch.var default is unbiased (ddof=1); guard n<=1 / tiny negative Dg.
    var = (ss - n * mean * mean) / jnp.maximum(n - 1.0, 1.0)
    dg = var + 0.15 * mean * mean
    return loss_weight * jnp.sqrt(jnp.maximum(dg, 0.0))


def _sigloss_ref(pred, gt, *, loss_weight=1.0, max_depth=None):
    """Pure-JAX reference (mirrors the PyTorch module with default flags)."""
    pred = pred.reshape(-1).astype(jnp.float32)
    gt = gt.reshape(-1).astype(jnp.float32)
    mask = gt > 0.0
    if max_depth is not None:
        mask = jnp.logical_and(mask, gt <= max_depth)
    g = jnp.where(mask, jnp.log(pred + EPS) - jnp.log(gt + EPS), 0.0)
    n = jnp.sum(mask.astype(jnp.float32))
    mean = jnp.sum(g) / n
    var = (jnp.sum(g * g) - n * mean * mean) / (n - 1.0)
    return loss_weight * jnp.sqrt(var + 0.15 * mean * mean)


if __name__ == "__main__":
    key = jax.random.PRNGKey(0)

    def make_inputs(k, shape, dtype):
        k1, k2, k3 = jax.random.split(k, 3)
        pred = jax.random.uniform(k1, shape, jnp.float32, 0.1, 10.0)
        gt = jax.random.uniform(k2, shape, jnp.float32, 0.1, 10.0)
        invalid = jax.random.bernoulli(k3, 0.2, shape)   # exercise valid_mask filter
        gt = jnp.where(invalid, 0.0, gt)
        return pred.astype(dtype), gt.astype(dtype)

    cases = [
        # (shape, dtype, block_rows override)
        ((2, 1, 32, 32), jnp.float32, None),     # aligned -> (rows, 128) lane-perfect view
        ((2, 1, 32, 32), jnp.bfloat16, None),    # bf16 on the wire, f32 accumulation
        ((2, 1, 15, 83), jnp.float32, None),     # misaligned N -> no-pad trailing-dim view
        ((2, 1, 16, 80), jnp.float32, 8),        # small blocks: ragged tail + clamped block
    ]

    keys = jax.random.split(key, len(cases))
    for (shape, dtype, br), k in zip(cases, keys):
        depth_pred, depth_gt = make_inputs(k, shape, dtype)
        loss = sigloss(depth_pred, depth_gt, loss_weight=1.0, block_rows=br)
        jax.block_until_ready(loss)
        ref = _sigloss_ref(depth_pred, depth_gt, loss_weight=1.0)
        assert jnp.allclose(loss, ref, rtol=1e-4, atol=1e-5), (shape, str(dtype), loss, ref)

    print("KERNEL_OK")
</pallas_src>

<mosaic_0001>
module attributes {stable_mosaic.version = 11 : i64} {
  func.func @_sigloss_partial_kernel(%arg0: i32, %arg1: i32, %arg2: memref<16x128xf32, #tpu.memory_space<vmem>>, %arg3: memref<16x128xf32, #tpu.memory_space<vmem>>, %arg4: memref<1x1x128xf32, #tpu.memory_space<vmem>>, %arg5: memref<1x128xf32, #tpu.memory_space<vmem>>, %arg6: memref<1x128xf32, #tpu.memory_space<vmem>>, %arg7: memref<1x128xf32, #tpu.memory_space<vmem>>) attributes {dimension_semantics = [#tpu.dimension_semantics<parallel>, #tpu.dimension_semantics<arbitrary>], iteration_bounds = array<i64: 1, 1>, scalar_prefetch = 0 : i64, scratch_operands = 3 : i64, tpu.core_type = #tpu.core_type<tc>, window_params = [{transform_indices = @transform_0, window_bounds = array<i64: 16, 128>}, {transform_indices = @transform_1, window_bounds = array<i64: 16, 128>}, {transform_indices = @transform_2, window_bounds = array<i64: 1, 1, 128>}]} {
    %c0_i32 = arith.constant 0 : i32
    %0 = arith.cmpi eq, %arg1, %c0_i32 : i32
    %1 = arith.extui %0 : i1 to i32
    %c0_i32_0 = arith.constant 0 : i32
    %2 = arith.cmpi ne, %1, %c0_i32_0 : i32
    scf.if %2 {
      %cst = arith.constant 0.000000e+00 : f32
      %18 = vector.broadcast %cst : f32 to vector<1x128xf32>
      %c0_10 = arith.constant 0 : index
      %c0_11 = arith.constant 0 : index
      %19 = vector.load %arg5[%c0_10, %c0_11] : memref<1x128xf32, #tpu.memory_space<vmem>>, vector<1x128xf32>
      tpu.vector_store %arg5[%c0_10, %c0_11], %18 {strides = array<i32>} : memref<1x128xf32, #tpu.memory_space<vmem>>, vector<1x128xf32>,
      %cst_12 = arith.constant 0.000000e+00 : f32
      %20 = vector.broadcast %cst_12 : f32 to vector<1x128xf32>
      %c0_13 = arith.constant 0 : index
      %c0_14 = arith.constant 0 : index
      %21 = vector.load %arg6[%c0_13, %c0_14] : memref<1x128xf32, #tpu.memory_space<vmem>>, vector<1x128xf32>
      tpu.vector_store %arg6[%c0_13, %c0_14], %20 {strides = array<i32>} : memref<1x128xf32, #tpu.memory_space<vmem>>, vector<1x128xf32>,
      %cst_15 = arith.constant 0.000000e+00 : f32
      %22 = vector.broadcast %cst_15 : f32 to vector<1x128xf32>
      %c0_16 = arith.constant 0 : index
      %c0_17 = arith.constant 0 : index
      %23 = vector.load %arg7[%c0_16, %c0_17] : memref<1x128xf32, #tpu.memory_space<vmem>>, vector<1x128xf32>
      tpu.vector_store %arg7[%c0_16, %c0_17], %22 {strides = array<i32>} : memref<1x128xf32, #tpu.memory_space<vmem>>, vector<1x128xf32>,
    } else {
    }
    %c0 = arith.constant 0 : index
    %c0_1 = arith.constant 0 : index
    %3 = vector.load %arg2[%c0, %c0_1] : memref<16x128xf32, #tpu.memory_space<vmem>>, vector<16x128xf32>
    %c0_2 = arith.constant 0 : index
    %c0_3 = arith.constant 0 : index
    %4 = vector.load %arg3[%c0_2, %c0_3] : memref<16x128xf32, #tpu.memory_space<vmem>>, vector<16x128xf32>
    %c1_i32 = arith.constant 1 : i32
    %5 = arith.muli %arg0, %c1_i32 : i32
    %6 = arith.addi %5, %arg1 : i32
    %c1_i32_4 = arith.constant 1 : i32
    %7 = arith.addi %6, %c1_i32_4 : i32
    %c16_i32 = arith.constant 16 : i32
    %8 = arith.muli %7, %c16_i32 : i32
    %c16_i32_5 = arith.constant 16 : i32
    %9 = arith.cmpi sgt, %8, %c16_i32_5 : i32
    %true = arith.constant true
    %10 = arith.xori %9, %true : i1
    %11 = arith.extui %10 : i1 to i32
    %c0_i32_6 = arith.constant 0 : i32
    %12 = arith.cmpi ne, %11, %c0_i32_6 : i32
    scf.if %12 {
      %cst = arith.constant 0.000000e+00 : f32
      %18 = vector.broadcast %cst : f32 to vector<16x128xf32>
      %19 = arith.cmpf ogt, %4, %18 : vector<16x128xf32>
      %cst_10 = arith.constant 1.000000e-03 : f32
      %20 = vector.broadcast %cst_10 : f32 to vector<16x128xf32>
      %21 = arith.addf %3, %20 : vector<16x128xf32>
      %cst_11 = arith.constant 1.000000e-03 : f32
      %22 = vector.broadcast %cst_11 : f32 to vector<16x128xf32>
      %23 = arith.addf %4, %22 : vector<16x128xf32>
      %24 = arith.divf %21, %23 : vector<16x128xf32>
      %25 = math.log %24 : vector<16x128xf32>
      %cst_12 = arith.constant 0.000000e+00 : f32
      %26 = vector.broadcast %cst_12 : f32 to vector<16x128xf32>
      %27 = arith.select %19, %25, %26 : vector<16x128xi1>, vector<16x128xf32>
      %28 = arith.extui %19 : vector<16x128xi1> to vector<16x128xi32>
      %29 = arith.sitofp %28 : vector<16x128xi32> to vector<16x128xf32>
      %c0_13 = arith.constant 0 : index
      %c0_14 = arith.constant 0 : index
      %30 = vector.load %arg5[%c0_13, %c0_14] : memref<1x128xf32, #tpu.memory_space<vmem>>, vector<1x128xf32>
      %cst_15 = arith.constant dense<0.000000e+00> : vector<128xf32>
      %31 = vector.multi_reduction <add>, %29, %cst_15 [0] : vector<16x128xf32> to vector<128xf32>
      %32 = vector.shape_cast %31 : vector<128xf32> to vector<1x128xf32>
      %33 = arith.addf %30, %32 : vector<1x128xf32>
      %c0_16 = arith.constant 0 : index
      %c0_17 = arith.constant 0 : index
      %34 = vector.load %arg5[%c0_16, %c0_17] : memref<1x128xf32, #tpu.memory_space<vmem>>, vector<1x128xf32>
      tpu.vector_store %arg5[%c0_16, %c0_17], %33 {strides = array<i32>} : memref<1x128xf32, #tpu.memory_space<vmem>>, vector<1x128xf32>,
      %c0_18 = arith.constant 0 : index
      %c0_19 = arith.constant 0 : index
      %35 = vector.load %arg6[%c0_18, %c0_19] : memref<1x128xf32, #tpu.memory_space<vmem>>, vector<1x128xf32>
      %cst_20 = arith.constant dense<0.000000e+00> : vector<128xf32>
      %36 = vector.multi_reduction <add>, %27, %cst_20 [0] : vector<16x128xf32> to vector<128xf32>
      %37 = vector.shape_cast %36 : vector<128xf32> to vector<1x128xf32>
      %38 = arith.addf %35, %37 : vector<1x128xf32>
      %c0_21 = arith.constant 0 : index
      %c0_22 = arith.constant 0 : index
      %39 = vector.load %arg6[%c0_21, %c0_22] : memref<1x128xf32, #tpu.memory_space<vmem>>, vector<1x128xf32>
      tpu.vector_store %arg6[%c0_21, %c0_22], %38 {strides = array<i32>} : memref<1x128xf32, #tpu.memory_space<vmem>>, vector<1x128xf32>,
      %c0_23 = arith.constant 0 : index
      %c0_24 = arith.constant 0 : index
      %40 = vector.load %arg7[%c0_23, %c0_24] : memref<1x128xf32, #tpu.memory_space<vmem>>, vector<1x128xf32>
      %41 = arith.mulf %27, %27 : vector<16x128xf32>
      %cst_25 = arith.constant dense<0.000000e+00> : vector<128xf32>
      %42 = vector.multi_reduction <add>, %41, %cst_25 [0] : vector<16x128xf32> to vector<128xf32>
      %43 = vector.shape_cast %42 : vector<128xf32> to vector<1x128xf32>
      %44 = arith.addf %40, %43 : vector<1x128xf32>
      %c0_26 = arith.constant 0 : index
      %c0_27 = arith.constant 0 : index
      %45 = vector.load %arg7[%c0_26, %c0_27] : memref<1x128xf32, #tpu.memory_space<vmem>>, vector<1x128xf32>
      tpu.vector_store %arg7[%c0_26, %c0_27], %44 {strides = array<i32>} : memref<1x128xf32, #tpu.memory_space<vmem>>, vector<1x128xf32>,
    } else {
    }
    %13 = arith.extui %9 : i1 to i32
    %c0_i32_7 = arith.constant 0 : i32
    %14 = arith.cmpi ne, %13, %c0_i32_7 : i32
    scf.if %14 {
      %18 = tpu.iota {dimensions = array<i32: 0>} : vector<16x128xi32>
      %c16_i32_10 = arith.constant 16 : i32
      %19 = arith.muli %6, %c16_i32_10 : i32
      %20 = vector.broadcast %19 : i32 to vector<16x128xi32>
      %21 = arith.addi %20, %18 : vector<16x128xi32>
      %c16_i32_11 = arith.constant 16 : i32
      %22 = vector.broadcast %c16_i32_11 : i32 to vector<16x128xi32>
      %23 = arith.cmpi slt, %21, %22 : vector<16x128xi32>
      %cst = arith.constant 0.000000e+00 : f32
      %24 = vector.broadcast %cst : f32 to vector<16x128xf32>
      %25 = arith.cmpf ogt, %4, %24 : vector<16x128xf32>
      %26 = arith.andi %25, %23 : vector<16x128xi1>
      %cst_12 = arith.constant 1.000000e-03 : f32
      %27 = vector.broadcast %cst_12 : f32 to vector<16x128xf32>
      %28 = arith.addf %3, %27 : vector<16x128xf32>
      %cst_13 = arith.constant 1.000000e-03 : f32
      %29 = vector.broadcast %cst_13 : f32 to vector<16x128xf32>
      %30 = arith.addf %4, %29 : vector<16x128xf32>
      %31 = arith.divf %28, %30 : vector<16x128xf32>
      %32 = math.log %31 : vector<16x128xf32>
      %cst_14 = arith.constant 0.000000e+00 : f32
      %33 = vector.broadcast %cst_14 : f32 to vector<16x128xf32>
      %34 = arith.select %26, %32, %33 : vector<16x128xi1>, vector<16x128xf32>
      %35 = arith.extui %26 : vector<16x128xi1> to vector<16x128xi32>
      %36 = arith.sitofp %35 : vector<16x128xi32> to vector<16x128xf32>
      %c0_15 = arith.constant 0 : index
      %c0_16 = arith.constant 0 : index
      %37 = vector.load %arg5[%c0_15, %c0_16] : memref<1x128xf32, #tpu.memory_space<vmem>>, vector<1x128xf32>
      %cst_17 = arith.constant dense<0.000000e+00> : vector<128xf32>
      %38 = vector.multi_reduction <add>, %36, %cst_17 [0] : vector<16x128xf32> to vector<128xf32>
      %39 = vector.shape_cast %38 : vector<128xf32> to vector<1x128xf32>
      %40 = arith.addf %37, %39 : vector<1x128xf32>
      %c0_18 = arith.constant 0 : index
      %c0_19 = arith.constant 0 : index
      %41 = vector.load %arg5[%c0_18, %c0_19] : memref<1x128xf32, #tpu.memory_space<vmem>>, vector<1x128xf32>
      tpu.vector_store %arg5[%c0_18, %c0_19], %40 {strides = array<i32>} : memref<1x128xf32, #tpu.memory_space<vmem>>, vector<1x128xf32>,
      %c0_20 = arith.constant 0 : index
      %c0_21 = arith.constant 0 : index
      %42 = vector.load %arg6[%c0_20, %c0_21] : memref<1x128xf32, #tpu.memory_space<vmem>>, vector<1x128xf32>
      %cst_22 = arith.constant dense<0.000000e+00> : vector<128xf32>
      %43 = vector.multi_reduction <add>, %34, %cst_22 [0] : vector<16x128xf32> to vector<128xf32>
      %44 = vector.shape_cast %43 : vector<128xf32> to vector<1x128xf32>
      %45 = arith.addf %42, %44 : vector<1x128xf32>
      %c0_23 = arith.constant 0 : index
      %c0_24 = arith.constant 0 : index
      %46 = vector.load %arg6[%c0_23, %c0_24] : memref<1x128xf32, #tpu.memory_space<vmem>>, vector<1x128xf32>
      tpu.vector_store %arg6[%c0_23, %c0_24], %45 {strides = array<i32>} : memref<1x128xf32, #tpu.memory_space<vmem>>, vector<1x128xf32>,
      %c0_25 = arith.constant 0 : index
      %c0_26 = arith.constant 0 : index
      %47 = vector.load %arg7[%c0_25, %c0_26] : memref<1x128xf32, #tpu.memory_space<vmem>>, vector<1x128xf32>
      %48 = arith.mulf %34, %34 : vector<16x128xf32>
      %cst_27 = arith.constant dense<0.000000e+00> : vector<128xf32>
      %49 = vector.multi_reduction <add>, %48, %cst_27 [0] : vector<16x128xf32> to vector<128xf32>
      %50 = vector.shape_cast %49 : vector<128xf32> to vector<1x128xf32>
      %51 = arith.addf %47, %50 : vector<1x128xf32>
      %c0_28 = arith.constant 0 : index
      %c0_29 = arith.constant 0 : index
      %52 = vector.load %arg7[%c0_28, %c0_29] : memref<1x128xf32, #tpu.memory_space<vmem>>, vector<1x128xf32>
      tpu.vector_store %arg7[%c0_28, %c0_29], %51 {strides = array<i32>} : memref<1x128xf32, #tpu.memory_space<vmem>>, vector<1x128xf32>,
    } else {
    }
    %c0_i32_8 = arith.constant 0 : i32
    %15 = arith.cmpi eq, %arg1, %c0_i32_8 : i32
    %16 = arith.extui %15 : i1 to i32
    %c0_i32_9 = arith.constant 0 : i32
    %17 = arith.cmpi ne, %16, %c0_i32_9 : i32
    scf.if %17 {
      %c0_10 = arith.constant 0 : index
      %c0_11 = arith.constant 0 : index
      %18 = vector.load %arg5[%c0_10, %c0_11] : memref<1x128xf32, #tpu.memory_space<vmem>>, vector<1x128xf32>
      %19 = vector.shape_cast %18 : vector<1x128xf32> to vector<1x1x128xf32>
      %cst = arith.constant dense<0.000000e+00> : vector<1xf32>
      %20 = vector.multi_reduction <add>, %19, %cst [1, 2] : vector<1x1x128xf32> to vector<1xf32>
      %21 = vector.shape_cast %20 : vector<1xf32> to vector<1x1x1xf32>
      %22 = vector.extract %21[0, 0, 0] : f32 from vector<1x1x1xf32>
      %23 = vector.broadcast %22 : f32 to vector<1x1xf32>
      %c0_12 = arith.constant 0 : index
      %c0_13 = arith.constant 0 : index
      %24 = vector.load %arg6[%c0_12, %c0_13] : memref<1x128xf32, #tpu.memory_space<vmem>>, vector<1x128xf32>
      %25 = vector.shape_cast %24 : vector<1x128xf32> to vector<1x1x128xf32>
      %cst_14 = arith.constant dense<0.000000e+00> : vector<1xf32>
      %26 = vector.multi_reduction <add>, %25, %cst_14 [1, 2] : vector<1x1x128xf32> to vector<1xf32>
      %27 = vector.shape_cast %26 : vector<1xf32> to vector<1x1x1xf32>
      %28 = vector.extract %27[0, 0, 0] : f32 from vector<1x1x1xf32>
      %29 = vector.broadcast %28 : f32 to vector<1x1xf32>
      %c0_15 = arith.constant 0 : index
      %c0_16 = arith.constant 0 : index
      %30 = vector.load %arg7[%c0_15, %c0_16] : memref<1x128xf32, #tpu.memory_space<vmem>>, vector<1x128xf32>
      %31 = vector.shape_cast %30 : vector<1x128xf32> to vector<1x1x128xf32>
      %cst_17 = arith.constant dense<0.000000e+00> : vector<1xf32>
      %32 = vector.multi_reduction <add>, %31, %cst_17 [1, 2] : vector<1x1x128xf32> to vector<1xf32>
      %33 = vector.shape_cast %32 : vector<1xf32> to vector<1x1x1xf32>
      %34 = vector.extract %33[0, 0, 0] : f32 from vector<1x1x1xf32>
      %35 = vector.broadcast %34 : f32 to vector<1x1xf32>
      %36 = tpu.iota {dimensions = array<i32: 1>} : vector<1x128xi32>
      %c0_i32_18 = arith.constant 0 : i32
      %37 = vector.broadcast %c0_i32_18 : i32 to vector<1x128xi32>
      %38 = arith.cmpi eq, %36, %37 : vector<1x128xi32>
      %cst_19 = arith.constant 0.000000e+00 : f32
      %39 = vector.shape_cast %23 : vector<1x1xf32> to vector<1x1xf32>
      %40 = vector.broadcast %39 : vector<1x1xf32> to vector<1x128xf32>
      %41 = vector.broadcast %cst_19 : f32 to vector<1x128xf32>
      %42 = arith.select %38, %40, %41 : vector<1x128xi1>, vector<1x128xf32>
      %c1_i32_20 = arith.constant 1 : i32
      %43 = vector.broadcast %c1_i32_20 : i32 to vector<1x128xi32>
      %44 = arith.cmpi eq, %36, %43 : vector<1x128xi32>
      %cst_21 = arith.constant 0.000000e+00 : f32
      %45 = vector.shape_cast %29 : vector<1x1xf32> to vector<1x1xf32>
      %46 = vector.broadcast %45 : vector<1x1xf32> to vector<1x128xf32>
      %47 = vector.broadcast %cst_21 : f32 to vector<1x128xf32>
      %48 = arith.select %44, %46, %47 : vector<1x128xi1>, vector<1x128xf32>
      %49 = arith.addf %42, %48 : vector<1x128xf32>
      %c2_i32 = arith.constant 2 : i32
      %50 = vector.broadcast %c2_i32 : i32 to vector<1x128xi32>
      %51 = arith.cmpi eq, %36, %50 : vector<1x128xi32>
      %cst_22 = arith.constant 0.000000e+00 : f32
      %52 = vector.shape_cast %35 : vector<1x1xf32> to vector<1x1xf32>
      %53 = vector.broadcast %52 : vector<1x1xf32> to vector<1x128xf32>
      %54 = vector.broadcast %cst_22 : f32 to vector<1x128xf32>
      %55 = arith.select %51, %53, %54 : vector<1x128xi1>, vector<1x128xf32>
      %56 = arith.addf %49, %55 : vector<1x128xf32>
      %c0_23 = arith.constant 0 : index
      %c0_24 = arith.constant 0 : index
      %c0_25 = arith.constant 0 : index
      %57 = vector.load %arg4[%c0_23, %c0_24, %c0_25] : memref<1x1x128xf32, #tpu.memory_space<vmem>>, vector<1x1x128xf32>
      %58 = vector.shape_cast %57 : vector<1x1x128xf32> to vector<1x128xf32>
      %59 = vector.shape_cast %56 : vector<1x128xf32> to vector<1x1x128xf32>
      tpu.vector_store %arg4[%c0_23, %c0_24, %c0_25], %59 {strides = array<i32>} : memref<1x1x128xf32, #tpu.memory_space<vmem>>, vector<1x1x128xf32>,
    } else {
    }
    return
  }
  func.func @transform_0(%arg0: i32, %arg1: i32) -> (i32, i32) {
    %c1_i32 = arith.constant 1 : i32
    %0 = arith.muli %arg0, %c1_i32 : i32
    %1 = arith.addi %0, %arg1 : i32
    %c0_i32 = arith.constant 0 : i32
    %2 = arith.minsi %1, %c0_i32 : i32
    %c0_i32_0 = arith.constant 0 : i32
    %c0_i32_1 = arith.constant 0 : i32
    return %2, %c0_i32_0 : i32, i32
  }
  func.func @transform_1(%arg0: i32, %arg1: i32) -> (i32, i32) {
    %c1_i32 = arith.constant 1 : i32
    %0 = arith.muli %arg0, %c1_i32 : i32
    %1 = arith.addi %0, %arg1 : i32
    %c0_i32 = arith.constant 0 : i32
    %2 = arith.minsi %1, %c0_i32 : i32
    %c0_i32_0 = arith.constant 0 : i32
    %c0_i32_1 = arith.constant 0 : i32
    return %2, %c0_i32_0 : i32, i32
  }
  func.func @transform_2(%arg0: i32, %arg1: i32) -> (i32, i32, i32) {
    %c0_i32 = arith.constant 0 : i32
    %c0_i32_0 = arith.constant 0 : i32
    %c0_i32_1 = arith.constant 0 : i32
    return %arg0, %c0_i32, %c0_i32_0 : i32, i32, i32
  }
}

</mosaic_0001>

<llo_original>
// kernel: tpu_custom_call.1
$region0: #{tpu_custom_call.1}
  #allocation0 [shape = 'u32[]', space=smem, size = 0x4, offset = 0x4, fixed_abs, tag = 'smem constant byte address 0x4 - core index']
  #allocation1 [shape = 'u32[144,128]{1,0:T(1,128)}', space=vmem, size = 0x12000, scoped, tag = 'internal scratch']
  #allocation2 [shape = 'f32[1,128]{1,0:T(1,128)}', space=vmem, size = 0x200, scoped, tag = 'scratch operand']
  #allocation3 [shape = 'f32[1,128]{1,0:T(1,128)}', space=vmem, size = 0x200, scoped, tag = 'scratch operand']
  #allocation4 [shape = 'f32[1,128]{1,0:T(1,128)}', space=vmem, size = 0x200, scoped, tag = 'scratch operand']
  %s0 = inlined_call_operand.hbm [shape: f32[16,128], index: 0, kind: input, shape index: {}]
  %s1 = inlined_call_operand.hbm [shape: f32[16,128], index: 1, kind: input, shape index: {}]
  %s2 = inlined_call_operand.hbm [shape: f32[1,1,128], index: 2, kind: output, shape index: {}]
  %s3 = sld [smem:[#allocation0]]
  $region42: #{tpu_custom_call.1} parent=0
    _
  %s5 = ssub.s32 1, %s3
  %s6 = scalar_select 0, %s5, %s3
  $region1: #{tpu_custom_call.1} parent=0
    #allocation5 [shape = 'u8[8192]{0}', space=vmem, size = 0x2000, scoped, tag = 'input window, operand 0, single buffered']
    #allocation6 [shape = 's32[1]{0}', space=sflag, size = 0x4, scoped, tag = 'scoped memory for tpu_custom_call.1']
    #allocation7 [shape = 's32[1]{0}', space=sflag, size = 0x4, scoped, tag = 'scoped memory for tpu_custom_call.1']
    #allocation8 [shape = 'u8[8192]{0}', space=vmem, size = 0x2000, scoped, tag = 'input window, operand 1, single buffered']
    #allocation9 [shape = 's32[1]{0}', space=sflag, size = 0x4, scoped, tag = 'scoped memory for tpu_custom_call.1']
    #allocation10 [shape = 'u8[512]{0}', space=vmem, size = 0x400, scoped, tag = 'output window, operand 0, single buffered']
    %7 = vsyncpa [#allocation6], 0
    %8 = vsyncpa [#allocation9], 0
    %9 = vsyncpa [#allocation7], 0
    // Predicated region
    $region2: #{tpu_custom_call.1} parent=1 // pred_check
      _
    $region3: #{tpu_custom_call.1} parent=1 // pred_check_branch
      %11 = sbr.rel (0) target = $region5
    $region4: #{tpu_custom_call.1} parent=1 // pred_region
      %s12 = sadd.s32 0, 0
      %p13 = scmp.lt.s32.totalorder %s12, 0
      %s14 = scalar_select %p13, %s12, 0
      %s15 = smul.u32 2, %s14
      %s17 = ssub.s32 256, 256
      %18 = vsyncadd [#allocation6], %s17
      %s19 = smul.addr %s15, 128
      %s20 = scalar_lea.hbm %s0, %s19
      %s21 = sshll.u32 [#allocation5], 4
      %s22 = int_to_ptr.vmem [resolvable:$true] %s21
      %27 = dma.hbm_to_vmem [thread:$0]  %s20, 256, %s22, [#allocation6], 128, 128, 8
    $region5: #{tpu_custom_call.1} parent=1 // pred_fallthru
      _
    // Predicated region
    $region6: #{tpu_custom_call.1} parent=1 // pred_check
      _
    $region7: #{tpu_custom_call.1} parent=1 // pred_check_branch
      %29 = sbr.rel (0) target = $region9
    $region8: #{tpu_custom_call.1} parent=1 // pred_region
      %s30 = sadd.s32 0, 0
      %p31 = scmp.lt.s32.totalorder %s30, 0
      %s32 = scalar_select %p31, %s30, 0
      %s33 = smul.u32 2, %s32
      %s35 = ssub.s32 256, 256
      %36 = vsyncadd [#allocation9], %s35
      %s37 = smul.addr %s33, 128
      %s38 = scalar_lea.hbm %s1, %s37
      %s39 = sshll.u32 [#allocation8], 4
      %s40 = int_to_ptr.vmem [resolvable:$true] %s39
      %45 = dma.hbm_to_vmem [thread:$0]  %s38, 256, %s40, [#allocation9], 128, 128, 8
    $region9: #{tpu_custom_call.1} parent=1 // pred_fallthru
      _
    // Predicated region
    $region10: #{tpu_custom_call.1} parent=1 // pred_check
      _
    $region11: #{tpu_custom_call.1} parent=1 // pred_check_branch
      %47 = sbr.rel (0) target = $region13
    $region12: #{tpu_custom_call.1} parent=1 // pred_region
      %48 = dma.done [#allocation6], 256
    $region13: #{tpu_custom_call.1} parent=1 // pred_fallthru
      _
    // Predicated region
    $region14: #{tpu_custom_call.1} parent=1 // pred_check
      _
    $region15: #{tpu_custom_call.1} parent=1 // pred_check_branch
      %50 = sbr.rel (0) target = $region17
    $region16: #{tpu_custom_call.1} parent=1 // pred_region
      %51 = dma.done [#allocation9], 256
    $region17: #{tpu_custom_call.1} parent=1 // pred_fallthru
      _
    %s52 = sadd.s32 0, 0
    %p53 = scmp.lt.s32.totalorder %s52, 0
    %s54 = scalar_select %p53, %s52, 0
    %s55 = smul.u32 2, %s54
    %s56 = sadd.s32 0, 0
    %p57 = scmp.lt.s32.totalorder %s56, 0
    %s58 = scalar_select %p57, %s56, 0
    %s59 = smul.u32 2, %s58
    %p60 = scmp.eq.s32.totalorder 0, 0
    // Predicated region
    $region18: #{tpu_custom_call.1} parent=1 // pred_check
      %p61 = pneg %p60
    $region19: #{tpu_custom_call.1} parent=1 // pred_check_branch
      %63 = sbr.rel (%p61) target = $region21
    $region20: #{tpu_custom_call.1} parent=1 // pred_region
      %64 = vst [vmem:[#allocation2] sm:$0x1] 0.0
      %65 = vst [vmem:[#allocation3] sm:$0x1] 0.0
      %66 = vst [vmem:[#allocation4] sm:$0x1] 0.0
    $region21: #{tpu_custom_call.1} parent=1 // pred_fallthru
      _
    %v67 = vld [vmem:[#allocation5] sm:$0xff]
    %v68 = vld [vmem:[#allocation5 + $0x8] sm:$0xff]
    %v69 = vld [vmem:[#allocation8] sm:$0xff]
    %v70 = vld [vmem:[#allocation8 + $0x8] sm:$0xff]
    %s71 = sadd.s32 0, 0
    %s72 = sadd.s32 %s71, 1
    %s73 = smul.u32 %s72, 16
    %p74 = scmp.gt.s32.totalorder %s73, 16
    %p75 = scmp.le.s32.totalorder %s73, 16
    // Predicated region
    $region22: #{tpu_custom_call.1} parent=1 // pred_check
      %p76 = pneg %p75
    $region23: #{tpu_custom_call.1} parent=1 // pred_check_branch
      %78 = sbr.rel (%p76) target = $region25
    $region24: #{tpu_custom_call.1} parent=1 // pred_region
      %vm79 = vcmp.gt.f32.partialorder %v69, 0.0
      %vm80 = vcmp.gt.f32.partialorder %v70, 0.0
      %v81 = vadd.f32 %v67, 0.001
      %v82 = vadd.f32 %v68, 0.001
      %v83 = vadd.f32 %v69, 0.001
      %v84 = vadd.f32 %v70, 0.001
      %v85 = vrcp.pop %v83
      %v86 = vmul.f32 %v81, %v85
      %v87 = vrcp.pop %v84
      %v88 = vmul.f32 %v82, %v87
      %v89 = vlog2.pop %v86
      %v90 = vmul.f32 %v89, 0.6931472
      %v91 = vlog2.pop %v88
      %v92 = vmul.f32 %v91, 0.6931472
      %v93 = vsel %vm79, %v90, 0.0
      %v94 = vsel %vm80, %v92, 0.0
      %v95 = vsel %vm79, 1, 0
      %v96 = vsel %vm80, 1, 0
      %v97 = vcvt.s32.f32 %v95
      %v98 = vcvt.s32.f32 %v96
      %v99 = vld [vmem:[#allocation2] sm:$0x1]
      %v100 = vadd.f32 %v97, %v98
      %v101 = vrot.slane %v100, 4
      %v102 = vadd.f32 %v100, %v101
      %v103 = vrot.slane %v102, 2
      %v104 = vadd.f32 %v102, %v103
      %v105 = vrot.slane %v104, 1
      %v106 = vadd.f32 %v104, %v105
      %v107 = vadd.f32 %v99, %v106
      %108 = vst [vmem:[#allocation2] sm:$0x1] %v107
      %v109 = vld [vmem:[#allocation3] sm:$0x1]
      %v110 = vadd.f32 %v93, %v94
      %v111 = vrot.slane %v110, 4
      %v112 = vadd.f32 %v110, %v111
      %v113 = vrot.slane %v112, 2
      %v114 = vadd.f32 %v112, %v113
      %v115 = vrot.slane %v114, 1
      %v116 = vadd.f32 %v114, %v115
      %v117 = vadd.f32 %v109, %v116
      %118 = vst [vmem:[#allocation3] sm:$0x1] %v117
      %v119 = vld [vmem:[#allocation4] sm:$0x1]
      %v120 = vmul.f32 %v93, %v93
      %v121 = vmul.f32 %v94, %v94
      %v122 = vadd.f32 %v120, %v121
      %v123 = vrot.slane %v122, 4
      %v124 = vadd.f32 %v122, %v123
      %v125 = vrot.slane %v124, 2
      %v126 = vadd.f32 %v124, %v125
      %v127 = vrot.slane %v126, 1
      %v128 = vadd.f32 %v126, %v127
      %v129 = vadd.f32 %v119, %v128
      %130 = vst [vmem:[#allocation4] sm:$0x1] %v129
    $region25: #{tpu_custom_call.1} parent=1 // pred_fallthru
      _
    // Predicated region
    $region26: #{tpu_custom_call.1} parent=1 // pred_check
      %p131 = pneg %p74
    $region27: #{tpu_custom_call.1} parent=1 // pred_check_branch
      %133 = sbr.rel (%p131) target = $region29
    $region28: #{tpu_custom_call.1} parent=1 // pred_region
      %v134 = vlaneseq
      %v135 = vshrl.u32 %v134, 7
      %v136 = vadd.s32 %v135, 8
      %s137 = smul.u32 %s71, 16
      %v138 = vstv %s137
      %v139 = vadd.s32 %v138, %v135
      %v140 = vadd.s32 %v138, %v136
      %vm141 = vcmp.lt.s32.totalorder %v139, 16
      %vm142 = vcmp.lt.s32.totalorder %v140, 16
      %vm143 = vcmp.gt.f32.partialorder %v69, 0.0
      %vm144 = vcmp.gt.f32.partialorder %v70, 0.0
      %vm145 = vmand %vm143, %vm141
      %vm146 = vmand %vm144, %vm142
      %v147 = vadd.f32 %v67, 0.001
      %v148 = vadd.f32 %v68, 0.001
      %v149 = vadd.f32 %v69, 0.001
      %v150 = vadd.f32 %v70, 0.001
      %v151 = vrcp.pop %v149
      %v152 = vmul.f32 %v147, %v151
      %v153 = vrcp.pop %v150
      %v154 = vmul.f32 %v148, %v153
      %v155 = vlog2.pop %v152
      %v156 = vmul.f32 %v155, 0.6931472
      %v157 = vlog2.pop %v154
      %v158 = vmul.f32 %v157, 0.6931472
      %v159 = vsel %vm145, %v156, 0.0
      %v160 = vsel %vm146, %v158, 0.0
      %v161 = vsel %vm145, 1, 0
      %v162 = vsel %vm146, 1, 0
      %v163 = vcvt.s32.f32 %v161
      %v164 = vcvt.s32.f32 %v162
      %v165 = vld [vmem:[#allocation2] sm:$0x1]
      %v166 = vadd.f32 %v163, %v164
      %v167 = vrot.slane %v166, 4
      %v168 = vadd.f32 %v166, %v167
      %v169 = vrot.slane %v168, 2
      %v170 = vadd.f32 %v168, %v169
      %v171 = vrot.slane %v170, 1
      %v172 = vadd.f32 %v170, %v171
      %v173 = vadd.f32 %v165, %v172
      %174 = vst [vmem:[#allocation2] sm:$0x1] %v173
      %v175 = vld [vmem:[#allocation3] sm:$0x1]
      %v176 = vadd.f32 %v159, %v160
      %v177 = vrot.slane %v176, 4
      %v178 = vadd.f32 %v176, %v177
      %v179 = vrot.slane %v178, 2
      %v180 = vadd.f32 %v178, %v179
      %v181 = vrot.slane %v180, 1
      %v182 = vadd.f32 %v180, %v181
      %v183 = vadd.f32 %v175, %v182
      %184 = vst [vmem:[#allocation3] sm:$0x1] %v183
      %v185 = vld [vmem:[#allocation4] sm:$0x1]
      %v186 = vmul.f32 %v159, %v159
      %v187 = vmul.f32 %v160, %v160
      %v188 = vadd.f32 %v186, %v187
      %v189 = vrot.slane %v188, 4
      %v190 = vadd.f32 %v188, %v189
      %v191 = vrot.slane %v190, 2
      %v192 = vadd.f32 %v190, %v191
      %v193 = vrot.slane %v192, 1
      %v194 = vadd.f32 %v192, %v193
      %v195 = vadd.f32 %v185, %v194
      %196 = vst [vmem:[#allocation4] sm:$0x1] %v195
    $region29: #{tpu_custom_call.1} parent=1 // pred_fallthru
      _
    // Predicated region
    $region30: #{tpu_custom_call.1} parent=1 // pred_check
      %p197 = pneg %p60
    $region31: #{tpu_custom_call.1} parent=1 // pred_check_branch
      %199 = sbr.rel (%p197) target = $region33
    $region32: #{tpu_custom_call.1} parent=1 // pred_region
      %v200 = vld [vmem:[#allocation2] sm:$0x1]
      %vm201 = vcmask 1040384
      %v202 = vsel %vm201, %v200, 0.0
      %203 = vadd.xlane.f32.xlu0 %v202
      %v204 = vpop.xlane.xlu0 %203
      %v205 = vrot.slane %v204, 4
      %v206 = vadd.f32 %v204, %v205
      %v207 = vrot.slane %v206, 2
      %v208 = vadd.f32 %v206, %v207
      %v209 = vrot.slane %v208, 1
      %v210 = vadd.f32 %v208, %v209
      %s211 = vtos %v210
      %v212 = vld [vmem:[#allocation3] sm:$0x1]
      %v213 = vsel %vm201, %v212, 0.0
      %214 = vadd.xlane.f32.xlu0 %v213
      %v215 = vpop.xlane.xlu0 %214
      %v216 = vrot.slane %v215, 4
      %v217 = vadd.f32 %v215, %v216
      %v218 = vrot.slane %v217, 2
      %v219 = vadd.f32 %v217, %v218
      %v220 = vrot.slane %v219, 1
      %v221 = vadd.f32 %v219, %v220
      %s222 = vtos %v221
      %v223 = vld [vmem:[#allocation4] sm:$0x1]
      %v224 = vsel %vm201, %v223, 0.0
      %225 = vadd.xlane.f32.xlu0 %v224
      %v226 = vpop.xlane.xlu0 %225
      %v227 = vrot.slane %v226, 4
      %v228 = vadd.f32 %v226, %v227
      %v229 = vrot.slane %v228, 2
      %v230 = vadd.f32 %v228, %v229
      %v231 = vrot.slane %v230, 1
      %v232 = vadd.f32 %v230, %v231
      %s233 = vtos %v232
      %v234 = vlaneseq
      %v235 = vand.u32 %v234, 127
      %vm236 = vcmp.eq.s32.totalorder %v235, 0
      %v237 = vstv %s211
      %v238 = vsel %vm236, %v237, 0.0
      %vm239 = vcmp.eq.s32.totalorder %v235, 1
      %v240 = vstv %s222
      %v241 = vsel %vm239, %v240, 0.0
      %v242 = vadd.f32 %v238, %v241
      %vm243 = vcmp.eq.s32.totalorder %v235, 2
      %v244 = vstv %s233
      %v245 = vsel %vm243, %v244, 0.0
      %v246 = vadd.f32 %v242, %v245
      %247 = vst [vmem:[#allocation10] sm:$0x1] %v246
    $region33: #{tpu_custom_call.1} parent=1 // pred_fallthru
      _
    // Predicated region
    $region34: #{tpu_custom_call.1} parent=1 // pred_check
      _
    $region35: #{tpu_custom_call.1} parent=1 // pred_check_branch
      %249 = sbr.rel (0) target = $region37
    $region36: #{tpu_custom_call.1} parent=1 // pred_region
      %s251 = ssub.s32 16, 16
      %252 = vsyncadd [#allocation7], %s251
      %s254 = sshll.u32 [#allocation10], 4
      %s255 = int_to_ptr.vmem [resolvable:$true] %s254
      %257 = dma.vmem_to_hbm [thread:$0]  %s255, 16, %s2, [#allocation7]
    $region37: #{tpu_custom_call.1} parent=1 // pred_fallthru
      _
    // Predicated region
    $region38: #{tpu_custom_call.1} parent=1 // pred_check
      _
    $region39: #{tpu_custom_call.1} parent=1 // pred_check_branch
      %259 = sbr.rel (0) target = $region41
    $region40: #{tpu_custom_call.1} parent=1 // pred_region
      %260 = dma.done [#allocation7], 16
    $region41: #{tpu_custom_call.1} parent=1 // pred_fallthru
      _
    %261 = vsyncpa [#allocation6], 1
    %262 = vsyncpa [#allocation9], 1
    %263 = vsyncpa [#allocation7], 1

</llo_original>
